<compile_context>
chip_gen: v5e
topology: v5e:2x2
jax: 0.10.0
libtpu: 0.0.40
codegen_flags: <defaults>
</compile_context>

<pallas_src>
import functools

import jax
import jax.numpy as jnp
from jax.experimental import pallas as pl
from jax.experimental.pallas import tpu as pltpu


def _default_num_cores():
    """Best-effort TensorCore count (2 on v7x, 1 on v5e/v6e); safe fallback 1."""
    try:
        info = pltpu.get_tpu_info()
        for attr in ("num_tensorcores", "tensorcore_count", "num_cores",
                     "cores_per_chip"):
            v = getattr(info, attr, None)
            if v:
                return max(1, int(v))
    except Exception:
        pass
    return 1


def _choose_tiling(rows, max_tr, ncores):
    """Pick (tr, tiles_per_core, ncores, num_tiles) with EXACT grid coverage.

    Guarantees ncores * tiles_per_core == num_tiles (no empty / out-of-range
    block indices), and tr is either a multiple of 8 or the full row count.
    """
    if rows <= max_tr:
        # Single tile per core.  Split across cores only if it splits evenly.
        if ncores > 1 and rows % (8 * ncores) == 0 and rows // ncores >= 8:
            return rows // ncores, 1, ncores, ncores
        return rows, 1, 1, 1
    # Multi-tile: tr is a multiple of 8; find one whose tile count divides
    # evenly across the requested cores (first candidate wins for ncores=1).
    for t in range(max_tr, 7, -8):
        nt = pl.cdiv(rows, t)
        if nt % ncores == 0:
            return t, nt // ncores, ncores, nt
    # Fallback: single core, largest tile.
    t = max_tr
    nt = pl.cdiv(rows, t)
    return t, nt, 1, nt


def _mse_sum_kernel(x_ref, y_ref, o_ref, acc_ref, *, rows, tiles_per_core,
                    num_tiles, mask_last_tile):
    """Accumulates sum((x - y)^2) for one core's row-tiles into o_ref (1,1)."""
    c = pl.program_id(0)          # core / partial-sum index ("parallel")
    j = pl.program_id(1)          # row-tile index within this core ("arbitrary")

    @pl.when(j == 0)
    def _init():
        acc_ref[...] = jnp.zeros_like(acc_ref)

    tr, nl = x_ref.shape

    def accumulate(sq):
        # Fold the block onto one vreg-shaped (8, nl) slab with aligned VALU
        # adds; no cross-lane/sublane work in the hot loop.
        if tr % 8 == 0:
            acc_ref[...] += sq.reshape(tr // 8, 8, nl).sum(axis=0)
        else:
            # Tiny-input fallback (single tile, rows not a multiple of 8).
            acc_ref[0:1, :] += jnp.sum(sq, axis=0, keepdims=True)

    def full_block():
        d = x_ref[...].astype(jnp.float32) - y_ref[...].astype(jnp.float32)
        accumulate(d * d)

    if mask_last_tile:
        # Only the globally-last tile is partial; every other step runs the
        # unmasked path (no iota / compare / select in the hot loop).
        tile_idx = c * tiles_per_core + j
        is_last = tile_idx == (num_tiles - 1)

        @pl.when(jnp.logical_not(is_last))
        def _full():
            full_block()

        @pl.when(is_last)
        def _masked():
            row0 = tile_idx * tr
            row_ids = row0 + jax.lax.broadcasted_iota(jnp.int32, (tr, 1), 0)
            valid = row_ids < rows                       # (tr, 1)
            d = x_ref[...].astype(jnp.float32) - y_ref[...].astype(jnp.float32)
            d = jnp.where(valid, d, 0.0)                 # NaN-safe for garbage
            accumulate(d * d)
    else:
        full_block()

    @pl.when(j == pl.num_programs(1) - 1)
    def _finalize():
        o_ref[...] = jnp.sum(acc_ref[...]).reshape(1, 1)


def my_loss(x, y, *, tile_rows=4096, lanes=128, num_cores=None):
    """Pallas equivalent of My_loss.forward: mean((x - y)**2) -> scalar f32."""
    assert x.shape == y.shape, "x and y must have the same shape"
    total_n = x.size
    if total_n == 0:
        return jnp.float32(float("nan"))  # matches torch.mean of empty tensor

    if num_cores is None:
        num_cores = _default_num_cores()
    num_cores = max(1, int(num_cores))

    itemsize = jnp.dtype(x.dtype).itemsize

    # Flatten to a lane-dense 2D slab in the native dtype (cast in-kernel).
    xf = x.reshape(-1)
    yf = y.reshape(-1)
    rem = total_n % lanes
    if rem:
        # Rare ragged-tail path: a (rows,128) reinterpretation of a
        # non-multiple-size buffer is impossible without a copy in XLA, so we
        # pad the < 128 missing elements (zero diff adds nothing; the mean
        # divides by the ORIGINAL count).  Aligned sizes never hit this.
        pad = lanes - rem
        xf = jnp.pad(xf, (0, pad))
        yf = jnp.pad(yf, (0, pad))
    rows = (total_n + lanes - 1) // lanes
    x2 = xf.reshape(rows, lanes)
    y2 = yf.reshape(rows, lanes)

    # Scale tile rows so each block stays ~2 MiB regardless of dtype, and cap
    # at 4 MiB/block so 2 inputs x 2 pipeline buffers <= 16 MiB (v7x-safe).
    max_tr = max(8, ((int(tile_rows) * 4) // itemsize) // 8 * 8)
    cap_tr = max(8, ((4 * 1024 * 1024) // (lanes * itemsize)) // 8 * 8)
    max_tr = min(max_tr, cap_tr)

    tr, tiles_per_core, ncores, num_tiles = _choose_tiling(rows, max_tr,
                                                           num_cores)
    mask_last_tile = (rows % tr) != 0
    grid = (ncores, tiles_per_core)

    in_spec = pl.BlockSpec((tr, lanes), lambda c, j: (c * tiles_per_core + j, 0))

    partial_sums = pl.pallas_call(
        functools.partial(_mse_sum_kernel, rows=rows,
                          tiles_per_core=tiles_per_core, num_tiles=num_tiles,
                          mask_last_tile=mask_last_tile),
        out_shape=jax.ShapeDtypeStruct((ncores, 1), jnp.float32),
        grid_spec=pltpu.PrefetchScalarGridSpec(
            num_scalar_prefetch=0,
            grid=grid,
            in_specs=[in_spec, in_spec],
            out_specs=pl.BlockSpec((1, 1), lambda c, j: (c, 0)),
            scratch_shapes=[pltpu.VMEM((8, lanes), jnp.float32)],
        ),
        compiler_params=pltpu.CompilerParams(
            dimension_semantics=("parallel", "arbitrary"),
            vmem_limit_bytes=32 * 1024 * 1024,  # actual pipelined use <= 16 MiB
        ),
        cost_estimate=pl.CostEstimate(
            flops=3 * total_n,
            transcendentals=0,
            bytes_accessed=2 * total_n * itemsize + 4 * ncores,
        ),
    )(x2, y2)

    return jnp.sum(partial_sums) / jnp.float32(total_n)


if __name__ == "__main__":
    key = jax.random.PRNGKey(0)
    kx, ky = jax.random.split(key)

    # 1) NCHW-like f32 inputs (matches the PyTorch module's typical use).
    x = jax.random.normal(kx, (2, 4, 16, 16), dtype=jnp.float32)
    y = jax.random.normal(ky, (2, 4, 16, 16), dtype=jnp.float32)
    loss = jax.block_until_ready(my_loss(x, y))
    ref = jnp.mean((x - y) ** 2)
    assert jnp.allclose(loss, ref, rtol=1e-5, atol=1e-6), (loss, ref)

    # 2) Same input, forced multi-tile + balanced 2-way core split (exact grid).
    loss2 = jax.block_until_ready(my_loss(x, y, tile_rows=8, num_cores=2))
    assert jnp.allclose(loss2, ref, rtol=1e-5, atol=1e-6), (loss2, ref)

    # 3) Ragged shape (numel not a multiple of 128) exercises the tail path.
    xr = jax.random.normal(kx, (2, 3, 15, 13), dtype=jnp.float32)
    yr = jax.random.normal(ky, (2, 3, 15, 13), dtype=jnp.float32)
    loss3 = jax.block_until_ready(my_loss(xr, yr))
    ref3 = jnp.mean((xr - yr) ** 2)
    assert jnp.allclose(loss3, ref3, rtol=1e-5, atol=1e-6), (loss3, ref3)

    # 4) Same ragged input with tiny tiles: rows % tr != 0 exercises the
    #    two-path pl.when (unmasked hot loop + masked last tile).
    loss4 = jax.block_until_ready(my_loss(xr, yr, tile_rows=8, num_cores=1))
    assert jnp.allclose(loss4, ref3, rtol=1e-5, atol=1e-6), (loss4, ref3)

    # 5) bf16 inputs stay bf16 in HBM; tile rows auto-scale (2x) so the block
    #    byte count stays ~2 MiB; cast to f32 happens inside the kernel.
    xb = x.astype(jnp.bfloat16)
    yb = y.astype(jnp.bfloat16)
    loss5 = jax.block_until_ready(my_loss(xb, yb))
    ref5 = jnp.mean((xb.astype(jnp.float32) - yb.astype(jnp.float32)) ** 2)
    assert jnp.allclose(loss5, ref5, rtol=1e-4, atol=1e-5), (loss5, ref5)

    # 6) Larger multi-tile case: unmasked multi-step accumulation path.
    xm = jax.random.normal(kx, (8, 128, 256), dtype=jnp.float32)
    ym = jax.random.normal(ky, (8, 128, 256), dtype=jnp.float32)
    loss6 = jax.block_until_ready(my_loss(xm, ym, tile_rows=256))
    ref6 = jnp.mean((xm - ym) ** 2)
    assert jnp.allclose(loss6, ref6, rtol=1e-5, atol=1e-6), (loss6, ref6)

    print("KERNEL_OK")
</pallas_src>

<mosaic_0001>
module attributes {stable_mosaic.version = 11 : i64} {
  func.func @_mse_sum_kernel(%arg0: i32, %arg1: i32, %arg2: memref<16x128xf32, #tpu.memory_space<vmem>>, %arg3: memref<16x128xf32, #tpu.memory_space<vmem>>, %arg4: memref<1x1xf32, #tpu.memory_space<vmem>>, %arg5: memref<8x128xf32, #tpu.memory_space<vmem>>) attributes {dimension_semantics = [#tpu.dimension_semantics<parallel>, #tpu.dimension_semantics<arbitrary>], iteration_bounds = array<i64: 1, 1>, scalar_prefetch = 0 : i64, scratch_operands = 1 : i64, tpu.core_type = #tpu.core_type<tc>, window_params = [{transform_indices = @transform_0, window_bounds = array<i64: 16, 128>}, {transform_indices = @transform_1, window_bounds = array<i64: 16, 128>}, {transform_indices = @transform_2, window_bounds = array<i64: 1, 1>}]} {
    %c0_i32 = arith.constant 0 : i32
    %0 = arith.cmpi eq, %arg1, %c0_i32 : i32
    %1 = arith.extui %0 : i1 to i32
    %c0_i32_0 = arith.constant 0 : i32
    %2 = arith.cmpi ne, %1, %c0_i32_0 : i32
    scf.if %2 {
      %cst_10 = arith.constant 0.000000e+00 : f32
      %15 = vector.broadcast %cst_10 : f32 to vector<8x128xf32>
      %c0_11 = arith.constant 0 : index
      %c0_12 = arith.constant 0 : index
      %16 = vector.load %arg5[%c0_11, %c0_12] : memref<8x128xf32, #tpu.memory_space<vmem>>, vector<8x128xf32>
      tpu.vector_store %arg5[%c0_11, %c0_12], %15 {strides = array<i32>} : memref<8x128xf32, #tpu.memory_space<vmem>>, vector<8x128xf32>,
    } else {
    }
    %c0 = arith.constant 0 : index
    %c0_1 = arith.constant 0 : index
    %3 = vector.load %arg2[%c0, %c0_1] : memref<16x128xf32, #tpu.memory_space<vmem>>, vector<16x128xf32>
    %c0_2 = arith.constant 0 : index
    %c0_3 = arith.constant 0 : index
    %4 = vector.load %arg3[%c0_2, %c0_3] : memref<16x128xf32, #tpu.memory_space<vmem>>, vector<16x128xf32>
    %5 = arith.subf %3, %4 : vector<16x128xf32>
    %6 = arith.mulf %5, %5 : vector<16x128xf32>
    %c0_4 = arith.constant 0 : index
    %c0_5 = arith.constant 0 : index
    %7 = vector.load %arg5[%c0_4, %c0_5] : memref<8x128xf32, #tpu.memory_space<vmem>>, vector<8x128xf32>
    %8 = vector.shape_cast %6 : vector<16x128xf32> to vector<2x8x128xf32>
    %cst = arith.constant dense<0.000000e+00> : vector<8x128xf32>
    %9 = vector.multi_reduction <add>, %8, %cst [0] : vector<2x8x128xf32> to vector<8x128xf32>
    %10 = arith.addf %7, %9 : vector<8x128xf32>
    %c0_6 = arith.constant 0 : index
    %c0_7 = arith.constant 0 : index
    %11 = vector.load %arg5[%c0_6, %c0_7] : memref<8x128xf32, #tpu.memory_space<vmem>>, vector<8x128xf32>
    tpu.vector_store %arg5[%c0_6, %c0_7], %10 {strides = array<i32>} : memref<8x128xf32, #tpu.memory_space<vmem>>, vector<8x128xf32>,
    %c0_i32_8 = arith.constant 0 : i32
    %12 = arith.cmpi eq, %arg1, %c0_i32_8 : i32
    %13 = arith.extui %12 : i1 to i32
    %c0_i32_9 = arith.constant 0 : i32
    %14 = arith.cmpi ne, %13, %c0_i32_9 : i32
    scf.if %14 {
      %c0_10 = arith.constant 0 : index
      %c0_11 = arith.constant 0 : index
      %15 = vector.load %arg5[%c0_10, %c0_11] : memref<8x128xf32, #tpu.memory_space<vmem>>, vector<8x128xf32>
      %16 = vector.shape_cast %15 : vector<8x128xf32> to vector<1x8x128xf32>
      %cst_12 = arith.constant dense<0.000000e+00> : vector<1xf32>
      %17 = vector.multi_reduction <add>, %16, %cst_12 [1, 2] : vector<1x8x128xf32> to vector<1xf32>
      %18 = vector.shape_cast %17 : vector<1xf32> to vector<1x1x1xf32>
      %19 = vector.extract %18[0, 0, 0] : f32 from vector<1x1x1xf32>
      %20 = vector.broadcast %19 : f32 to vector<1x1xf32>
      %c0_13 = arith.constant 0 : index
      %c0_14 = arith.constant 0 : index
      %21 = vector.load %arg4[%c0_13, %c0_14] : memref<1x1xf32, #tpu.memory_space<vmem>>, vector<1x1xf32>
      tpu.vector_store %arg4[%c0_13, %c0_14], %20 {strides = array<i32>} : memref<1x1xf32, #tpu.memory_space<vmem>>, vector<1x1xf32>,
    } else {
    }
    return
  }
  func.func @transform_0(%arg0: i32, %arg1: i32) -> (i32, i32) {
    %c1_i32 = arith.constant 1 : i32
    %0 = arith.muli %arg0, %c1_i32 : i32
    %1 = arith.addi %0, %arg1 : i32
    %c0_i32 = arith.constant 0 : i32
    %c0_i32_0 = arith.constant 0 : i32
    return %1, %c0_i32 : i32, i32
  }
  func.func @transform_1(%arg0: i32, %arg1: i32) -> (i32, i32) {
    %c1_i32 = arith.constant 1 : i32
    %0 = arith.muli %arg0, %c1_i32 : i32
    %1 = arith.addi %0, %arg1 : i32
    %c0_i32 = arith.constant 0 : i32
    %c0_i32_0 = arith.constant 0 : i32
    return %1, %c0_i32 : i32, i32
  }
  func.func @transform_2(%arg0: i32, %arg1: i32) -> (i32, i32) {
    %c0_i32 = arith.constant 0 : i32
    %c0_i32_0 = arith.constant 0 : i32
    return %arg0, %c0_i32 : i32, i32
  }
}

</mosaic_0001>

<llo_original>
// kernel: tpu_custom_call.1
$region0: #{tpu_custom_call.1}
  #allocation0 [shape = 'u32[]', space=smem, size = 0x4, offset = 0x4, fixed_abs, tag = 'smem constant byte address 0x4 - core index']
  #allocation1 [shape = 'u32[72,128]{1,0:T(1,128)}', space=vmem, size = 0x9000, scoped, tag = 'internal scratch']
  #allocation2 [shape = 'f32[8,128]{1,0:T(8,128)}', space=vmem, size = 0x1000, scoped, tag = 'scratch operand']
  %s0 = inlined_call_operand.hbm [shape: f32[16,128], index: 0, kind: input, shape index: {}]
  %s1 = inlined_call_operand.hbm [shape: f32[16,128], index: 1, kind: input, shape index: {}]
  %s2 = inlined_call_operand.hbm [shape: f32[1,1], index: 2, kind: output, shape index: {}]
  %s3 = sld [smem:[#allocation0]]
  $region34: #{tpu_custom_call.1} parent=0
    _
  %s5 = ssub.s32 1, %s3
  %s6 = scalar_select 0, %s5, %s3
  $region1: #{tpu_custom_call.1} parent=0
    #allocation3 [shape = 'u8[8192]{0}', space=vmem, size = 0x2000, scoped, tag = 'input window, operand 0, single buffered']
    #allocation4 [shape = 's32[1]{0}', space=sflag, size = 0x4, scoped, tag = 'scoped memory for tpu_custom_call.1']
    #allocation5 [shape = 's32[1]{0}', space=sflag, size = 0x4, scoped, tag = 'scoped memory for tpu_custom_call.1']
    #allocation6 [shape = 'u8[8192]{0}', space=vmem, size = 0x2000, scoped, tag = 'input window, operand 1, single buffered']
    #allocation7 [shape = 's32[1]{0}', space=sflag, size = 0x4, scoped, tag = 'scoped memory for tpu_custom_call.1']
    #allocation8 [shape = 'u8[512]{0}', space=vmem, size = 0x400, scoped, tag = 'output window, operand 0, single buffered']
    %7 = vsyncpa [#allocation4], 0
    %8 = vsyncpa [#allocation7], 0
    %9 = vsyncpa [#allocation5], 0
    // Predicated region
    $region2: #{tpu_custom_call.1} parent=1 // pred_check
      _
    $region3: #{tpu_custom_call.1} parent=1 // pred_check_branch
      %11 = sbr.rel (0) target = $region5
    $region4: #{tpu_custom_call.1} parent=1 // pred_region
      %s12 = sadd.s32 0, 0
      %s13 = smul.u32 2, %s12
      %15 = vsyncadd [#allocation4], 0
      %s16 = smul.addr %s13, 8
      %s17 = scalar_lea.hbm %s0, %s16
      %s18 = sshll.u32 %s17, 4
      %s19 = int_to_ptr.hbm [resolvable:$true] %s18
      %s20 = sshll.u32 [#allocation3], 4
      %s21 = int_to_ptr.vmem [resolvable:$true] %s20
      %26 = dma.hbm_to_vmem [thread:$0]  %s19, 256, %s21, [#allocation4], 128, 128, 8
    $region5: #{tpu_custom_call.1} parent=1 // pred_fallthru
      _
    // Predicated region
    $region6: #{tpu_custom_call.1} parent=1 // pred_check
      _
    $region7: #{tpu_custom_call.1} parent=1 // pred_check_branch
      %28 = sbr.rel (0) target = $region9
    $region8: #{tpu_custom_call.1} parent=1 // pred_region
      %s29 = sadd.s32 0, 0
      %s30 = smul.u32 2, %s29
      %32 = vsyncadd [#allocation7], 0
      %s33 = smul.addr %s30, 8
      %s34 = scalar_lea.hbm %s1, %s33
      %s35 = sshll.u32 %s34, 4
      %s36 = int_to_ptr.hbm [resolvable:$true] %s35
      %s37 = sshll.u32 [#allocation6], 4
      %s38 = int_to_ptr.vmem [resolvable:$true] %s37
      %43 = dma.hbm_to_vmem [thread:$0]  %s36, 256, %s38, [#allocation7], 128, 128, 8
    $region9: #{tpu_custom_call.1} parent=1 // pred_fallthru
      _
    // Predicated region
    $region10: #{tpu_custom_call.1} parent=1 // pred_check
      _
    $region11: #{tpu_custom_call.1} parent=1 // pred_check_branch
      %45 = sbr.rel (0) target = $region13
    $region12: #{tpu_custom_call.1} parent=1 // pred_region
      %47 = dma.done [#allocation4], 256
    $region13: #{tpu_custom_call.1} parent=1 // pred_fallthru
      _
    // Predicated region
    $region14: #{tpu_custom_call.1} parent=1 // pred_check
      _
    $region15: #{tpu_custom_call.1} parent=1 // pred_check_branch
      %49 = sbr.rel (0) target = $region17
    $region16: #{tpu_custom_call.1} parent=1 // pred_region
      %51 = dma.done [#allocation7], 256
    $region17: #{tpu_custom_call.1} parent=1 // pred_fallthru
      _
    %s52 = sadd.s32 0, 0
    %s53 = smul.u32 2, %s52
    %s54 = sadd.s32 0, 0
    %s55 = smul.u32 2, %s54
    %p56 = scmp.eq.s32.totalorder 0, 0
    // Predicated region
    $region18: #{tpu_custom_call.1} parent=1 // pred_check
      %p57 = pneg %p56
    $region19: #{tpu_custom_call.1} parent=1 // pred_check_branch
      %59 = sbr.rel (%p57) target = $region21
    $region20: #{tpu_custom_call.1} parent=1 // pred_region
      %60 = vst [vmem:[#allocation2] sm:$0xff] 0.0
    $region21: #{tpu_custom_call.1} parent=1 // pred_fallthru
      _
    %v61 = vld [vmem:[#allocation3] sm:$0xff]
    %v62 = vld [vmem:[#allocation3 + $0x8] sm:$0xff]
    %v63 = vld [vmem:[#allocation6] sm:$0xff]
    %v64 = vld [vmem:[#allocation6 + $0x8] sm:$0xff]
    %v65 = vsub.f32 %v61, %v63
    %v66 = vsub.f32 %v62, %v64
    %v67 = vmul.f32 %v65, %v65
    %v68 = vmul.f32 %v66, %v66
    %v69 = vld [vmem:[#allocation2] sm:$0xff]
    %v70 = vadd.f32 %v67, %v68
    %v71 = vadd.f32 %v69, %v70
    %72 = vst [vmem:[#allocation2] sm:$0xff] %v71
    // Predicated region
    $region22: #{tpu_custom_call.1} parent=1 // pred_check
      %p73 = pneg %p56
    $region23: #{tpu_custom_call.1} parent=1 // pred_check_branch
      %75 = sbr.rel (%p73) target = $region25
    $region24: #{tpu_custom_call.1} parent=1 // pred_region
      %v76 = vld [vmem:[#allocation2] sm:$0xff]
      %77 = vadd.xlane.f32.xlu0 %v76
      %v78 = vpop.xlane.xlu0 %77
      %v79 = vrot.slane %v78, 4
      %v80 = vadd.f32 %v78, %v79
      %v81 = vrot.slane %v80, 2
      %v82 = vadd.f32 %v80, %v81
      %v83 = vrot.slane %v82, 1
      %v84 = vadd.f32 %v82, %v83
      %s85 = vtos %v84
      %v86 = vstv %s85
      %vm87 = vcmask 0
      %88 = vst.msk [vmem:[#allocation8] sm:$0x1] %vm87, %v86
    $region25: #{tpu_custom_call.1} parent=1 // pred_fallthru
      _
    // Predicated region
    $region26: #{tpu_custom_call.1} parent=1 // pred_check
      _
    $region27: #{tpu_custom_call.1} parent=1 // pred_check_branch
      %90 = sbr.rel (0) target = $region29
    $region28: #{tpu_custom_call.1} parent=1 // pred_region
      %92 = vsyncadd [#allocation5], 0
      %s94 = sshll.u32 [#allocation8], 4
      %s95 = int_to_ptr.vmem [resolvable:$true] %s94
      %s96 = sshll.u32 %s2, 4
      %s97 = int_to_ptr.hbm [resolvable:$true] %s96
      %99 = dma.vmem_to_hbm [thread:$0]  %s95, 16, %s97, [#allocation5]
    $region29: #{tpu_custom_call.1} parent=1 // pred_fallthru
      _
    // Predicated region
    $region30: #{tpu_custom_call.1} parent=1 // pred_check
      _
    $region31: #{tpu_custom_call.1} parent=1 // pred_check_branch
      %101 = sbr.rel (0) target = $region33
    $region32: #{tpu_custom_call.1} parent=1 // pred_region
      %103 = dma.done [#allocation5], 16
    $region33: #{tpu_custom_call.1} parent=1 // pred_fallthru
      _
    %104 = vsyncpa [#allocation4], 1
    %105 = vsyncpa [#allocation7], 1
    %106 = vsyncpa [#allocation5], 1

</llo_original>
